<compile_context>
chip_gen: v7x
topology: tpu7x:2x2x1
jax: 0.10.0
libtpu: 0.0.40
codegen_flags: <defaults>
</compile_context>

<pallas_src>
import functools

import jax
import jax.numpy as jnp
from jax.experimental import pallas as pl
from jax.experimental.pallas import tpu as pltpu


def aug_lag_loss_kernel(scal_ref, yp_ref, yg_ref, th_ref, psi_ref, out_ref,
                        *, inv_n, n_lam):
    # ---- objective: MSE(y_pred, y_gt), reduction='mean' (scalar) ------------
    R = yp_ref.shape[0]                     # rows of the lane-dense slab
    nchunks = R // 8                        # full (8,128) chunks
    obj_sum = None

    if nchunks > 0:
        nacc = min(4, nchunks)              # independent accumulators
        accs = []
        for a in range(nacc):               # first chunks INITIALIZE (no zero vreg)
            r = 8 * a
            d = (yp_ref[r:r + 8, :].astype(jnp.float32)
                 - yg_ref[r:r + 8, :].astype(jnp.float32))
            accs.append(d * d)
        for c in range(nacc, nchunks):      # static, fully unrolled
            r = 8 * c
            d = (yp_ref[r:r + 8, :].astype(jnp.float32)
                 - yg_ref[r:r + 8, :].astype(jnp.float32))
            a = c % nacc
            accs[a] = accs[a] + d * d
        folded = accs[0]
        for a in range(1, nacc):            # combine the partials once
            folded = folded + accs[a]
        obj_sum = jnp.sum(folded)           # single XLU reduce

    rem = R - 8 * nchunks                   # trailing partial chunk (< 8 rows)
    if rem > 0:
        r = 8 * nchunks
        d = (yp_ref[r:R, :].astype(jnp.float32)
             - yg_ref[r:R, :].astype(jnp.float32))
        tail = jnp.sum(d * d)
        obj_sum = tail if obj_sum is None else obj_sum + tail

    obj = obj_sum * inv_n                   # static 1/N, no vector divide

    # ---- hoisted scalars (SMEM, read once) -----------------------------------
    scale = scal_ref[n_lam] * 0.5           # penalty / 2
    lam = [scal_ref[k] for k in range(n_lam)]

    # ---- fused regularizers: sum_k e_k * (lambda_k + (rho/2) * e_k) ----------
    e0 = th_ref[0] - psi_ref[0]
    acc = e0 * (lam[0] + scale * e0)
    for k in range(1, n_lam):               # K is small & static -> unrolled
        ek = th_ref[k] - psi_ref[k]
        acc = acc + ek * (lam[k] + scale * ek)

    # scalar obj broadcasts against the (M, N) regularizer (PyTorch scalar+tensor)
    out_ref[...] = (obj + acc).astype(out_ref.dtype)


def aug_lagrangian_loss(y_pred, y_gt, theta_stack, psi_stack, lam, penalty):
    """theta_stack/psi_stack: (K, M, N); lam: (K,); penalty: (1,)."""
    K, M, N = theta_stack.shape
    total = int(y_pred.size)

    # Lane-dense slab: flatten to (rows, 128). Keep the input dtype on the wire
    # (bf16 halves DMA bytes); the kernel upcasts per-chunk to f32.
    flat_p = y_pred.reshape(-1)
    flat_g = y_gt.reshape(-1)
    padded = ((total + 127) // 128) * 128
    if padded != total:
        # TODO(synk): this still materializes one padded HBM copy when total is
        # not a multiple of 128; a fully copy-free path would keep the slab 1-D
        # and mask the tail lanes in-kernel. Zero padding contributes 0 to the
        # squared diff; the mean divides by the TRUE element count.
        flat_p = jnp.pad(flat_p, (0, padded - total))
        flat_g = jnp.pad(flat_g, (0, padded - total))
    rows = padded // 128
    yp2d = flat_p.reshape(rows, 128)
    yg2d = flat_g.reshape(rows, 128)

    # Merge the K Lagrange multipliers and the penalty into ONE SMEM operand.
    scal = jnp.concatenate([lam.astype(jnp.float32),
                            penalty.astype(jnp.float32).reshape(-1)])

    kernel = functools.partial(aug_lag_loss_kernel,
                               inv_n=1.0 / float(total),
                               n_lam=K)

    act_bytes = 2 * padded * yp2d.dtype.itemsize
    par_bytes = 2 * int(theta_stack.size) * theta_stack.dtype.itemsize
    out_bytes = M * N * 4
    cost = pl.CostEstimate(flops=3 * total + 5 * K * M * N,
                           transcendentals=0,
                           bytes_accessed=act_bytes + par_bytes + out_bytes)

    return pl.pallas_call(
        kernel,
        out_shape=jax.ShapeDtypeStruct((M, N), jnp.float32),
        in_specs=[
            pl.BlockSpec(memory_space=pltpu.MemorySpace.SMEM),   # [lam..., penalty]
            pl.BlockSpec(memory_space=pltpu.MemorySpace.VMEM),   # y_pred slab
            pl.BlockSpec(memory_space=pltpu.MemorySpace.VMEM),   # y_gt slab
            pl.BlockSpec(memory_space=pltpu.MemorySpace.VMEM),   # theta (K,M,N)
            pl.BlockSpec(memory_space=pltpu.MemorySpace.VMEM),   # psi   (K,M,N)
        ],
        out_specs=pl.BlockSpec(memory_space=pltpu.MemorySpace.VMEM),
        cost_estimate=cost,
    )(scal, yp2d, yg2d, theta_stack, psi_stack)


def reference(y_pred, y_gt, theta_stack, psi_stack, lam, penalty):
    obj = jnp.mean((y_pred.astype(jnp.float32) - y_gt.astype(jnp.float32)) ** 2)
    lag = jnp.zeros(theta_stack.shape[1:], jnp.float32)
    aug = jnp.zeros(theta_stack.shape[1:], jnp.float32)
    for k in range(theta_stack.shape[0]):
        e = theta_stack[k] - psi_stack[k]
        lag = lag + lam[k] * e
        aug = aug + e ** 2
    return obj + lag + penalty[0] / 2.0 * aug


if __name__ == "__main__":
    key = jax.random.PRNGKey(0)
    k1, k2, k3, k4, k5 = jax.random.split(key, 5)

    # y_pred / y_gt in NCHW, small shapes.
    B, C, H, W = 2, 4, 16, 16
    y_pred = jax.random.normal(k1, (B, C, H, W), dtype=jnp.float32)
    y_gt = jax.random.normal(k2, (B, C, H, W), dtype=jnp.float32)

    # theta_0: two same-shaped parameters ("w1","w2"), deterministic init.
    M, N = 8, 128
    theta0_w1 = jax.random.normal(k3, (M, N), dtype=jnp.float32) * 0.1
    theta0_w2 = jax.random.normal(k4, (M, N), dtype=jnp.float32) * 0.1
    theta0 = jnp.stack([theta0_w1, theta0_w2], axis=0)           # (K, M, N)

    # psi = clone(theta_0); Lagrangian multipliers via Lag_initializer (non-zero
    # so the Lagrangian_regularizer term is exercised); init_penalty = 1.0.
    psi = theta0
    lam = jnp.array([0.1, -0.2], dtype=jnp.float32)
    penalty = jnp.array([1.0], dtype=jnp.float32)

    # Current iterate theta_n (perturbed so the constraint violation is non-zero).
    theta_n = theta0 + 0.05 * jax.random.normal(k5, theta0.shape, dtype=jnp.float32)

    out = aug_lagrangian_loss(y_pred, y_gt, theta_n, psi, lam, penalty)
    out = jax.block_until_ready(out)

    ref = reference(y_pred, y_gt, theta_n, psi, lam, penalty)
    assert out.shape == (M, N)
    assert jnp.allclose(out, ref, atol=1e-5, rtol=1e-5)

    print("KERNEL_OK")
</pallas_src>

<mosaic_0001>
module attributes {stable_mosaic.version = 11 : i64} {
  func.func @aug_lag_loss_kernel(%arg0: memref<3xf32, #tpu.memory_space<smem>>, %arg1: memref<16x128xf32, #tpu.memory_space<vmem>>, %arg2: memref<16x128xf32, #tpu.memory_space<vmem>>, %arg3: memref<2x8x128xf32, #tpu.memory_space<vmem>>, %arg4: memref<2x8x128xf32, #tpu.memory_space<vmem>>, %arg5: memref<8x128xf32, #tpu.memory_space<vmem>>) attributes {dimension_semantics = [], scalar_prefetch = 0 : i64, scratch_operands = 0 : i64, tpu.core_type = #tpu.core_type<tc>} {
    %c0 = arith.constant 0 : index
    %c0_0 = arith.constant 0 : index
    %0 = vector.load %arg1[%c0, %c0_0] : memref<16x128xf32, #tpu.memory_space<vmem>>, vector<8x128xf32>
    %c0_1 = arith.constant 0 : index
    %c0_2 = arith.constant 0 : index
    %1 = vector.load %arg2[%c0_1, %c0_2] : memref<16x128xf32, #tpu.memory_space<vmem>>, vector<8x128xf32>
    %2 = arith.subf %0, %1 : vector<8x128xf32>
    %3 = arith.mulf %2, %2 : vector<8x128xf32>
    %c8 = arith.constant 8 : index
    %c0_3 = arith.constant 0 : index
    %4 = vector.load %arg1[%c8, %c0_3] : memref<16x128xf32, #tpu.memory_space<vmem>>, vector<8x128xf32>
    %c8_4 = arith.constant 8 : index
    %c0_5 = arith.constant 0 : index
    %5 = vector.load %arg2[%c8_4, %c0_5] : memref<16x128xf32, #tpu.memory_space<vmem>>, vector<8x128xf32>
    %6 = arith.subf %4, %5 : vector<8x128xf32>
    %7 = arith.mulf %6, %6 : vector<8x128xf32>
    %8 = arith.addf %3, %7 : vector<8x128xf32>
    %9 = vector.shape_cast %8 : vector<8x128xf32> to vector<1x8x128xf32>
    %cst = arith.constant dense<0.000000e+00> : vector<1xf32>
    %10 = vector.multi_reduction <add>, %9, %cst [1, 2] : vector<1x8x128xf32> to vector<1xf32>
    %11 = vector.shape_cast %10 : vector<1xf32> to vector<1x1x1xf32>
    %12 = vector.extract %11[0, 0, 0] : f32 from vector<1x1x1xf32>
    %cst_6 = arith.constant 4.8828125E-4 : f32
    %13 = arith.mulf %12, %cst_6 : f32
    %c2 = arith.constant 2 : index
    %14 = memref.load %arg0[%c2] : memref<3xf32, #tpu.memory_space<smem>>
    %cst_7 = arith.constant 5.000000e-01 : f32
    %15 = arith.mulf %14, %cst_7 : f32
    %c0_8 = arith.constant 0 : index
    %16 = memref.load %arg0[%c0_8] : memref<3xf32, #tpu.memory_space<smem>>
    %c1 = arith.constant 1 : index
    %17 = memref.load %arg0[%c1] : memref<3xf32, #tpu.memory_space<smem>>
    %c0_9 = arith.constant 0 : index
    %c0_10 = arith.constant 0 : index
    %c0_11 = arith.constant 0 : index
    %18 = vector.load %arg3[%c0_9, %c0_10, %c0_11] : memref<2x8x128xf32, #tpu.memory_space<vmem>>, vector<1x8x128xf32>
    %19 = vector.shape_cast %18 : vector<1x8x128xf32> to vector<8x128xf32>
    %c0_12 = arith.constant 0 : index
    %c0_13 = arith.constant 0 : index
    %c0_14 = arith.constant 0 : index
    %20 = vector.load %arg4[%c0_12, %c0_13, %c0_14] : memref<2x8x128xf32, #tpu.memory_space<vmem>>, vector<1x8x128xf32>
    %21 = vector.shape_cast %20 : vector<1x8x128xf32> to vector<8x128xf32>
    %22 = arith.subf %19, %21 : vector<8x128xf32>
    %23 = vector.broadcast %15 : f32 to vector<8x128xf32>
    %24 = arith.mulf %23, %22 : vector<8x128xf32>
    %25 = vector.broadcast %16 : f32 to vector<8x128xf32>
    %26 = arith.addf %25, %24 : vector<8x128xf32>
    %27 = arith.mulf %22, %26 : vector<8x128xf32>
    %c1_15 = arith.constant 1 : index
    %c0_16 = arith.constant 0 : index
    %c0_17 = arith.constant 0 : index
    %28 = vector.load %arg3[%c1_15, %c0_16, %c0_17] : memref<2x8x128xf32, #tpu.memory_space<vmem>>, vector<1x8x128xf32>
    %29 = vector.shape_cast %28 : vector<1x8x128xf32> to vector<8x128xf32>
    %c1_18 = arith.constant 1 : index
    %c0_19 = arith.constant 0 : index
    %c0_20 = arith.constant 0 : index
    %30 = vector.load %arg4[%c1_18, %c0_19, %c0_20] : memref<2x8x128xf32, #tpu.memory_space<vmem>>, vector<1x8x128xf32>
    %31 = vector.shape_cast %30 : vector<1x8x128xf32> to vector<8x128xf32>
    %32 = arith.subf %29, %31 : vector<8x128xf32>
    %33 = vector.broadcast %15 : f32 to vector<8x128xf32>
    %34 = arith.mulf %33, %32 : vector<8x128xf32>
    %35 = vector.broadcast %17 : f32 to vector<8x128xf32>
    %36 = arith.addf %35, %34 : vector<8x128xf32>
    %37 = arith.mulf %32, %36 : vector<8x128xf32>
    %38 = arith.addf %27, %37 : vector<8x128xf32>
    %39 = vector.broadcast %13 : f32 to vector<8x128xf32>
    %40 = arith.addf %39, %38 : vector<8x128xf32>
    %c0_21 = arith.constant 0 : index
    %c0_22 = arith.constant 0 : index
    %41 = vector.load %arg5[%c0_21, %c0_22] : memref<8x128xf32, #tpu.memory_space<vmem>>, vector<8x128xf32>
    tpu.vector_store %arg5[%c0_21, %c0_22], %40 {strides = array<i32>} : memref<8x128xf32, #tpu.memory_space<vmem>>, vector<8x128xf32>,
    return
  }
}

</mosaic_0001>

<llo_original>
// kernel: tpu_custom_call.1
$region0: #{tpu_custom_call.1}
  #allocation0 [shape = 'u32[]', space=smem, size = 0x4, offset = 0x4, fixed_abs, tag = 'smem constant byte address 0x4 - core index']
  #allocation1 [shape = 'u32[144,128]{1,0:T(1,128)}', space=vmem, size = 0x12000, scoped, tag = 'internal scratch']
  %s0 = inlined_call_operand.hbm [shape: f32[3], index: 0, kind: input, shape index: {}]
  %s1 = inlined_call_operand.hbm [shape: f32[16,128], index: 1, kind: input, shape index: {}]
  %s2 = inlined_call_operand.hbm [shape: f32[16,128], index: 2, kind: input, shape index: {}]
  %s3 = inlined_call_operand.hbm [shape: f32[2,8,128], index: 3, kind: input, shape index: {}]
  %s4 = inlined_call_operand.hbm [shape: f32[2,8,128], index: 4, kind: input, shape index: {}]
  %s5 = inlined_call_operand.hbm [shape: f32[8,128], index: 5, kind: output, shape index: {}]
  %s6 = sld [smem:[#allocation0]]
  $region50: #{tpu_custom_call.1} parent=0
    _
  %s8 = ssub.s32 1, %s6
  %s9 = scalar_select 0, %s8, %s6
  $region1: #{tpu_custom_call.1} parent=0
    #allocation2 [shape = 'u8[512]{0}', space=smem, size = 0x200, scoped, tag = 'input window, operand 0, single buffered']
    #allocation3 [shape = 's32[1]{0}', space=sflag, size = 0x4, scoped, tag = 'scoped memory for tpu_custom_call.1']
    #allocation4 [shape = 's32[1]{0}', space=sflag, size = 0x4, scoped, tag = 'scoped memory for tpu_custom_call.1']
    #allocation5 [shape = 's32[1]{0}', space=sflag, size = 0x4, scoped, tag = 'scoped memory for tpu_custom_call.1']
    #allocation6 [shape = 'u8[8192]{0}', space=vmem, size = 0x2000, scoped, tag = 'input window, operand 1, single buffered']
    #allocation7 [shape = 'u8[8192]{0}', space=vmem, size = 0x2000, scoped, tag = 'input window, operand 2, single buffered']
    #allocation8 [shape = 's32[1]{0}', space=sflag, size = 0x4, scoped, tag = 'scoped memory for tpu_custom_call.1']
    #allocation9 [shape = 'u8[8192]{0}', space=vmem, size = 0x2000, scoped, tag = 'input window, operand 3, single buffered']
    #allocation10 [shape = 'u8[8192]{0}', space=vmem, size = 0x2000, scoped, tag = 'input window, operand 4, single buffered']
    #allocation11 [shape = 's32[1]{0}', space=sflag, size = 0x4, scoped, tag = 'scoped memory for tpu_custom_call.1']
    #allocation12 [shape = 'u8[4096]{0}', space=vmem, size = 0x1000, scoped, tag = 'output window, operand 0, single buffered']
    %10 = vsyncpa [#allocation5], 0
    %11 = vsyncpa [#allocation3], 0
    %12 = vsyncpa [#allocation8], 0
    %13 = vsyncpa [#allocation11], 0
    %14 = vsyncpa [#allocation4], 0
    // Predicated region
    $region2: #{tpu_custom_call.1} parent=1 // pred_check
      _
    $region3: #{tpu_custom_call.1} parent=1 // pred_check_branch
      %16 = sbr.rel (0) target = $region5
    $region4: #{tpu_custom_call.1} parent=1 // pred_region
      %s18 = ssub.s32 16, 16
      %19 = vsyncadd [#allocation5], %s18
      %22 = dma.hbm_to_smem %s0, 16, [#allocation2], [#allocation5]
    $region5: #{tpu_custom_call.1} parent=1 // pred_fallthru
      _
    // Predicated region
    $region6: #{tpu_custom_call.1} parent=1 // pred_check
      _
    $region7: #{tpu_custom_call.1} parent=1 // pred_check_branch
      %24 = sbr.rel (0) target = $region9
    $region8: #{tpu_custom_call.1} parent=1 // pred_region
      %s26 = ssub.s32 256, 256
      %27 = vsyncadd [#allocation3], %s26
      %s28 = sshll.u32 [#allocation6], 4
      %s29 = int_to_ptr.vmem [resolvable:$true] %s28
      %34 = dma.hbm_to_vmem [thread:$0]  %s1, 256, %s29, [#allocation3], 128, 128, 8
    $region9: #{tpu_custom_call.1} parent=1 // pred_fallthru
      _
    // Predicated region
    $region10: #{tpu_custom_call.1} parent=1 // pred_check
      _
    $region11: #{tpu_custom_call.1} parent=1 // pred_check_branch
      %36 = sbr.rel (0) target = $region13
    $region12: #{tpu_custom_call.1} parent=1 // pred_region
      %s38 = ssub.s32 256, 256
      %39 = vsyncadd [#allocation8], %s38
      %s40 = sshll.u32 [#allocation7], 4
      %s41 = int_to_ptr.vmem [resolvable:$true] %s40
      %46 = dma.hbm_to_vmem [thread:$0]  %s2, 256, %s41, [#allocation8], 128, 128, 8
    $region13: #{tpu_custom_call.1} parent=1 // pred_fallthru
      _
    // Predicated region
    $region14: #{tpu_custom_call.1} parent=1 // pred_check
      _
    $region15: #{tpu_custom_call.1} parent=1 // pred_check_branch
      %48 = sbr.rel (0) target = $region17
    $region16: #{tpu_custom_call.1} parent=1 // pred_region
      %s50 = ssub.s32 256, 256
      %51 = vsyncadd [#allocation8], %s50
      %s52 = sshll.u32 [#allocation9], 4
      %s53 = int_to_ptr.vmem [resolvable:$true] %s52
      %58 = dma.hbm_to_vmem [thread:$0]  %s3, 256, %s53, [#allocation8], 128, 128, 8
    $region17: #{tpu_custom_call.1} parent=1 // pred_fallthru
      _
    // Predicated region
    $region18: #{tpu_custom_call.1} parent=1 // pred_check
      _
    $region19: #{tpu_custom_call.1} parent=1 // pred_check_branch
      %60 = sbr.rel (0) target = $region21
    $region20: #{tpu_custom_call.1} parent=1 // pred_region
      %s62 = ssub.s32 256, 256
      %63 = vsyncadd [#allocation11], %s62
      %s64 = sshll.u32 [#allocation10], 4
      %s65 = int_to_ptr.vmem [resolvable:$true] %s64
      %70 = dma.hbm_to_vmem [thread:$0]  %s4, 256, %s65, [#allocation11], 128, 128, 8
    $region21: #{tpu_custom_call.1} parent=1 // pred_fallthru
      _
    // Predicated region
    $region22: #{tpu_custom_call.1} parent=1 // pred_check
      _
    $region23: #{tpu_custom_call.1} parent=1 // pred_check_branch
      %72 = sbr.rel (0) target = $region25
    $region24: #{tpu_custom_call.1} parent=1 // pred_region
      %73 = dma.done [#allocation5], 16
    $region25: #{tpu_custom_call.1} parent=1 // pred_fallthru
      _
    // Predicated region
    $region26: #{tpu_custom_call.1} parent=1 // pred_check
      _
    $region27: #{tpu_custom_call.1} parent=1 // pred_check_branch
      %75 = sbr.rel (0) target = $region29
    $region28: #{tpu_custom_call.1} parent=1 // pred_region
      %76 = dma.done [#allocation3], 256
    $region29: #{tpu_custom_call.1} parent=1 // pred_fallthru
      _
    // Predicated region
    $region30: #{tpu_custom_call.1} parent=1 // pred_check
      _
    $region31: #{tpu_custom_call.1} parent=1 // pred_check_branch
      %78 = sbr.rel (0) target = $region33
    $region32: #{tpu_custom_call.1} parent=1 // pred_region
      %79 = dma.done [#allocation8], 256
    $region33: #{tpu_custom_call.1} parent=1 // pred_fallthru
      _
    // Predicated region
    $region34: #{tpu_custom_call.1} parent=1 // pred_check
      _
    $region35: #{tpu_custom_call.1} parent=1 // pred_check_branch
      %81 = sbr.rel (0) target = $region37
    $region36: #{tpu_custom_call.1} parent=1 // pred_region
      %82 = dma.done [#allocation8], 256
    $region37: #{tpu_custom_call.1} parent=1 // pred_fallthru
      _
    // Predicated region
    $region38: #{tpu_custom_call.1} parent=1 // pred_check
      _
    $region39: #{tpu_custom_call.1} parent=1 // pred_check_branch
      %84 = sbr.rel (0) target = $region41
    $region40: #{tpu_custom_call.1} parent=1 // pred_region
      %85 = dma.done [#allocation11], 256
    $region41: #{tpu_custom_call.1} parent=1 // pred_fallthru
      _
    %86 = sfence
    %v87 = vld [vmem:[#allocation6] sm:$0xff]
    %v88 = vld [vmem:[#allocation7] sm:$0xff]
    %v89 = vsub.f32 %v87, %v88
    %v90 = vmul.f32 %v89, %v89
    %v91 = vld [vmem:[#allocation6 + $0x8] sm:$0xff]
    %v92 = vld [vmem:[#allocation7 + $0x8] sm:$0xff]
    %v93 = vsub.f32 %v91, %v92
    %v94 = vmul.f32 %v93, %v93
    %v95 = vadd.f32 %v90, %v94
    %96 = vadd.xlane.f32.xlu0 %v95
    %v97 = vpop.xlane.xlu0 %96
    %v98 = vrot.slane %v97, 4
    %v99 = vadd.f32 %v97, %v98
    %v100 = vrot.slane %v99, 2
    %v101 = vadd.f32 %v99, %v100
    %v102 = vrot.slane %v101, 1
    %v103 = vadd.f32 %v101, %v102
    %s104 = vtos %v103
    %s105 = smul.f32 %s104, 0.00048828125
    %s106 = sld [smem:[#allocation2 + $0x2]]
    %s107 = smul.f32 %s106, 0.5
    %s108 = sld [smem:[#allocation2]]
    %s109 = sld [smem:[#allocation2 + $0x1]]
    %v110 = vld [vmem:[#allocation9] sm:$0xff]
    %v111 = vld [vmem:[#allocation10] sm:$0xff]
    %v112 = vsub.f32 %v110, %v111
    %v113 = vstv %s107
    %v114 = vmul.f32 %v113, %v112
    %v115 = vstv %s108
    %v116 = vadd.f32 %v115, %v114
    %v117 = vmul.f32 %v112, %v116
    %s118 = scalar_lea.vmem [#allocation9], 8
    %v119 = vld [vmem:[%s118] sm:$0xff]
    %s120 = scalar_lea.vmem [#allocation10], 8
    %v121 = vld [vmem:[%s120] sm:$0xff]
    %v122 = vsub.f32 %v119, %v121
    %v123 = vmul.f32 %v113, %v122
    %v124 = vstv %s109
    %v125 = vadd.f32 %v124, %v123
    %v126 = vmul.f32 %v122, %v125
    %v127 = vadd.f32 %v117, %v126
    %v128 = vstv %s105
    %v129 = vadd.f32 %v128, %v127
    %130 = vst [vmem:[#allocation12] sm:$0xff] %v129
    // Predicated region
    $region42: #{tpu_custom_call.1} parent=1 // pred_check
      _
    $region43: #{tpu_custom_call.1} parent=1 // pred_check_branch
      %132 = sbr.rel (0) target = $region45
    $region44: #{tpu_custom_call.1} parent=1 // pred_region
      %s134 = ssub.s32 128, 128
      %135 = vsyncadd [#allocation4], %s134
      %s137 = sshll.u32 [#allocation12], 4
      %s138 = int_to_ptr.vmem [resolvable:$true] %s137
      %140 = dma.vmem_to_hbm [thread:$0]  %s138, 128, %s5, [#allocation4]
    $region45: #{tpu_custom_call.1} parent=1 // pred_fallthru
      _
    // Predicated region
    $region46: #{tpu_custom_call.1} parent=1 // pred_check
      _
    $region47: #{tpu_custom_call.1} parent=1 // pred_check_branch
      %142 = sbr.rel (0) target = $region49
    $region48: #{tpu_custom_call.1} parent=1 // pred_region
      %143 = dma.done [#allocation4], 128
    $region49: #{tpu_custom_call.1} parent=1 // pred_fallthru
      _
    %144 = vsyncpa [#allocation3], 1
    %145 = vsyncpa [#allocation8], 1
    %146 = vsyncpa [#allocation11], 1
    %147 = vsyncpa [#allocation4], 1
    %148 = vsyncpa [#allocation5], 1

</llo_original>
